<compile_context>
chip_gen: v7x
topology: tpu7x:2x2x1
jax: 0.10.0
libtpu: 0.0.40
codegen_flags: <defaults>
</compile_context>

<pallas_src>
import functools
import math

import jax
import jax.numpy as jnp
from jax.experimental import pallas as pl
from jax.experimental.pallas import tpu as pltpu


def _round_up(x, m):
    return ((x + m - 1) // m) * m


def _vmem_capacity_bytes():
    """Physical VMEM per core (128 MiB v5e/v6e, 64 MiB v7x); safe fallback."""
    try:
        info = pltpu.get_tpu_info()
        cap = getattr(info, "vmem_capacity_bytes", None)
        if isinstance(cap, int) and cap > 0:
            return cap
    except Exception:
        pass
    return 64 * 1024 * 1024  # conservative (v7x-sized) default


def _num_tensorcores():
    """Best-effort TensorCore count (2 on v7x, 1 on v5e/v6e)."""
    try:
        info = pltpu.get_tpu_info()
        for name in ("num_cores", "core_count", "num_tensorcores", "tensorcore_count"):
            v = getattr(info, name, None)
            if isinstance(v, int) and v > 0:
                return v
    except Exception:
        pass
    return 1


def _pick_tk(K, tk_max, sub):
    """Largest tk <= tk_max that divides K and keeps lane-dense (x128) blocks.

    Falls back to the full K block when no such divisor exists (the last dim of
    the x block must be a multiple of 128 or equal K).
    """
    del sub  # multiples of 128 already satisfy every sublane-pack requirement
    tk_max = min(tk_max, K)
    if tk_max >= K:
        return K
    divs = [d for d in range(128, tk_max + 1, 128) if K % d == 0]
    if divs:
        return max(divs)
    return K


def _ntp_kernel_out_acc(x_ref, w_ref, b_ref, o_ref, *, scale):
    """f32 output: accumulate directly into the resident output block."""
    k = pl.program_id(2)

    @pl.when(k == 0)
    def _init():
        o_ref[...] = jnp.zeros_like(o_ref)

    o_ref[...] += jnp.dot(x_ref[...], w_ref[...], preferred_element_type=jnp.float32)

    @pl.when(k == pl.num_programs(2) - 1)
    def _finalize():
        o_ref[...] = scale * o_ref[...] + b_ref[...].astype(jnp.float32)


def _ntp_kernel_scratch(x_ref, w_ref, b_ref, o_ref, acc_ref, *, scale):
    """Non-f32 output: f32 scratch accumulator, cast once on the final store."""
    k = pl.program_id(2)

    @pl.when(k == 0)
    def _init():
        acc_ref[...] = jnp.zeros_like(acc_ref)

    acc_ref[...] += jnp.dot(x_ref[...], w_ref[...], preferred_element_type=jnp.float32)

    @pl.when(k == pl.num_programs(2) - 1)
    def _finalize():
        out = scale * acc_ref[...] + b_ref[...].astype(jnp.float32)
        o_ref[...] = out.astype(o_ref.dtype)


def _weight_spec(tk, tn, buffers):
    index_map = lambda i, j, k: (k, j)
    if buffers > 2:
        try:
            return pl.BlockSpec((tk, tn), index_map, pipeline_mode=pl.Buffered(buffers))
        except Exception:
            pass  # older jax without pipeline_mode: fall back to double buffering
    return pl.BlockSpec((tk, tn), index_map)


def ntp_linear(x, weight, bias, *, tm=None, tn=None, tk=None,
               compute_dtype=None, out_dtype=None):
    """y = (1 / sqrt(in_features)) * (x @ weight) + bias."""
    M, K = x.shape
    Kw, N = weight.shape
    assert K == Kw and bias.shape == (1, N)
    scale = 1.0 / math.sqrt(K)

    out_dtype = jnp.dtype(out_dtype) if out_dtype is not None else jnp.dtype(x.dtype)
    if compute_dtype is not None:
        # Opt-in reduced-precision operands (bf16 MXU rate, half the HBM bytes);
        # accumulation and the scale+bias epilogue stay in f32.
        cd = jnp.dtype(compute_dtype)
        x = x.astype(cd)
        weight = weight.astype(cd)
    in_dtype = jnp.dtype(x.dtype)
    in_sz = in_dtype.itemsize
    out_sz = out_dtype.itemsize
    b_sz = jnp.dtype(bias.dtype).itemsize

    # --- tile-size selection -------------------------------------------------
    sub = 16 if in_dtype == jnp.bfloat16 else 8
    tm_user, tn_user, tk_user = tm is not None, tn is not None, tk is not None
    if in_dtype == jnp.bfloat16:
        tm0, tn0, tk0 = 1024, 1024, 1024
    else:
        tm0, tn0, tk0 = 512, 512, 512
    if M <= 256 and not (tn_user or tk_user):
        # GEMV-like regime: tiny tm frees VMEM, so stream wider/deeper W tiles.
        tn0 *= 2
        tk0 *= 2
    if tm_user:
        tm0 = tm
    if tn_user:
        tn0 = tn
    if tk_user:
        tk0 = tk

    tm = max(sub, min(_round_up(tm0, sub), _round_up(M, sub)))
    tn = max(128, min(_round_up(tn0, 128), _round_up(N, 128)))

    # Megacore (v7x): make sure the parallel axes expose >= 2 blocks.
    cores = _num_tensorcores()
    if (cores >= 2 and not (tm_user or tn_user)
            and pl.cdiv(M, tm) * pl.cdiv(N, tn) < cores):
        if N >= 256:
            tn = max(128, min(tn, _round_up(pl.cdiv(N, 2), 128)))
        elif M >= 2 * sub:
            tm = max(sub, min(tm, _round_up(pl.cdiv(M, 2), sub)))

    tk = _pick_tk(K, tk0, sub)

    # --- generation-aware VMEM budget ----------------------------------------
    vmem_cap = _vmem_capacity_bytes()               # 128 MiB v5e/v6e, 64 MiB v7x
    vmem_limit = max(32 << 20, int(0.75 * vmem_cap))
    budget = max(16 << 20, vmem_limit - (8 << 20))  # headroom for compiler scratch

    use_out_acc = out_dtype == jnp.float32

    def footprint(tm_, tn_, tk_, wbufs):
        f = 2 * tm_ * tk_ * in_sz          # x (double-buffered)
        f += wbufs * tk_ * tn_ * in_sz     # weight
        f += 2 * tn_ * b_sz                # bias
        f += 2 * tm_ * tn_ * out_sz        # output buffers
        if not use_out_acc:
            f += tm_ * tn_ * 4             # f32 scratch accumulator
        return f

    for _ in range(32):
        if footprint(tm, tn, tk, 2) <= budget:
            break
        if tk % 256 == 0:
            tk //= 2                       # even divisor of K stays a divisor, stays x128
        elif tn > 128:
            tn = max(128, _round_up(tn // 2, 128))
        elif tm > sub:
            tm = max(sub, _round_up(tm // 2, sub))
        else:
            break

    grid = (pl.cdiv(M, tm), pl.cdiv(N, tn), pl.cdiv(K, tk))

    # Small-M weight streaming: deeper buffering hides W-DMA latency jitter.
    use_buffered = (M <= 256 and grid[1] * grid[2] >= 3
                    and footprint(tm, tn, tk, 3) <= budget)
    weight_bufs = 3 if use_buffered else 2

    # --- cost estimate (accounts for operand re-reads across tiles) ----------
    cost = pl.CostEstimate(
        flops=2 * M * N * K,
        transcendentals=0,
        bytes_accessed=(M * K * in_sz * grid[1]
                        + K * N * in_sz * grid[0]
                        + N * b_sz
                        + M * N * out_sz),
    )

    kernel = functools.partial(
        _ntp_kernel_out_acc if use_out_acc else _ntp_kernel_scratch, scale=scale)
    scratch_shapes = () if use_out_acc else (pltpu.VMEM((tm, tn), jnp.float32),)

    return pl.pallas_call(
        kernel,
        out_shape=jax.ShapeDtypeStruct((M, N), out_dtype),
        grid_spec=pltpu.PrefetchScalarGridSpec(
            num_scalar_prefetch=0,
            grid=grid,
            in_specs=[
                pl.BlockSpec((tm, tk), lambda i, j, k: (i, k)),   # x tile
                _weight_spec(tk, tn, weight_bufs),                # weight tile
                pl.BlockSpec((1, tn), lambda i, j, k: (0, j)),    # bias tile
            ],
            out_specs=pl.BlockSpec((tm, tn), lambda i, j, k: (i, j)),
            scratch_shapes=scratch_shapes,
        ),
        compiler_params=pltpu.CompilerParams(
            dimension_semantics=("parallel", "parallel", "arbitrary"),
            vmem_limit_bytes=vmem_limit,
        ),
        cost_estimate=cost,
    )(x, weight, bias)


def _reference(x, weight, bias):
    return (1.0 / math.sqrt(x.shape[-1])) * jnp.dot(x, weight, precision="highest") + bias


if __name__ == "__main__":
    # --- small config matching the module defaults (GEMV-like regime) --------
    in_features, out_features, M = 32, 128, 16
    zero_init = False
    factor = 0.0 if zero_init else 1.0

    kx, kw, kb = jax.random.split(jax.random.PRNGKey(0), 3)
    x = jax.random.normal(kx, (M, in_features), dtype=jnp.float32)
    weight = factor * jax.random.normal(kw, (in_features, out_features), jnp.float32)
    bias = factor * jax.random.normal(kb, (1, out_features), jnp.float32)

    out = jax.block_until_ready(ntp_linear(x, weight, bias))
    ref = _reference(x, weight, bias)
    assert out.shape == (M, out_features)
    assert jnp.allclose(out, ref, atol=1e-4, rtol=1e-4), "small-shape mismatch"

    # --- tiled M/N/K path: accumulate-into-output, multi-step reduction ------
    M2, K2, N2 = 384, 256, 512
    kx2, kw2, kb2 = jax.random.split(jax.random.PRNGKey(1), 3)
    x2 = jax.random.normal(kx2, (M2, K2), dtype=jnp.float32)
    w2 = jax.random.normal(kw2, (K2, N2), dtype=jnp.float32)
    b2 = jax.random.normal(kb2, (1, N2), dtype=jnp.float32)
    out2 = jax.block_until_ready(ntp_linear(x2, w2, b2, tm=128, tn=256, tk=128))
    ref2 = _reference(x2, w2, b2)
    assert out2.shape == (M2, N2)
    assert jnp.allclose(out2, ref2, atol=1e-3, rtol=1e-3), "tiled-path mismatch"

    # --- small-M weight-streaming path (deep weight buffering, multi-step K) -
    kx3, kw3, kb3 = jax.random.split(jax.random.PRNGKey(2), 3)
    x3 = jax.random.normal(kx3, (16, 256), dtype=jnp.float32)
    w3 = jax.random.normal(kw3, (256, 512), jnp.float32)
    b3 = jax.random.normal(kb3, (1, 512), jnp.float32)
    out3 = jax.block_until_ready(ntp_linear(x3, w3, b3, tn=256, tk=128))
    ref3 = _reference(x3, w3, b3)
    assert jnp.allclose(out3, ref3, atol=1e-3, rtol=1e-3), "small-M streaming mismatch"

    print("KERNEL_OK")
</pallas_src>

<mosaic_0001>
module attributes {stable_mosaic.version = 11 : i64} {
  func.func @_ntp_kernel_out_acc(%arg0: i32, %arg1: i32, %arg2: i32, %arg3: memref<16x32xf32, #tpu.memory_space<vmem>>, %arg4: memref<32x128xf32, #tpu.memory_space<vmem>>, %arg5: memref<1x128xf32, #tpu.memory_space<vmem>>, %arg6: memref<16x128xf32, #tpu.memory_space<vmem>>) attributes {dimension_semantics = [#tpu.dimension_semantics<parallel>, #tpu.dimension_semantics<parallel>, #tpu.dimension_semantics<arbitrary>], iteration_bounds = array<i64: 1, 1, 1>, scalar_prefetch = 0 : i64, scratch_operands = 0 : i64, tpu.core_type = #tpu.core_type<tc>, window_params = [{transform_indices = @transform_0, window_bounds = array<i64: 16, 32>}, {transform_indices = @transform_1, window_bounds = array<i64: 32, 128>}, {transform_indices = @transform_2, window_bounds = array<i64: 1, 128>}, {transform_indices = @transform_3, window_bounds = array<i64: 16, 128>}]} {
    %c0_i32 = arith.constant 0 : i32
    %0 = arith.cmpi eq, %arg2, %c0_i32 : i32
    %1 = arith.extui %0 : i1 to i32
    %c0_i32_0 = arith.constant 0 : i32
    %2 = arith.cmpi ne, %1, %c0_i32_0 : i32
    scf.if %2 {
      %cst_10 = arith.constant 0.000000e+00 : f32
      %12 = vector.broadcast %cst_10 : f32 to vector<16x128xf32>
      %c0_11 = arith.constant 0 : index
      %c0_12 = arith.constant 0 : index
      %13 = vector.load %arg6[%c0_11, %c0_12] : memref<16x128xf32, #tpu.memory_space<vmem>>, vector<16x128xf32>
      tpu.vector_store %arg6[%c0_11, %c0_12], %12 {strides = array<i32>} : memref<16x128xf32, #tpu.memory_space<vmem>>, vector<16x128xf32>,
    } else {
    }
    %c0 = arith.constant 0 : index
    %c0_1 = arith.constant 0 : index
    %3 = vector.load %arg6[%c0, %c0_1] : memref<16x128xf32, #tpu.memory_space<vmem>>, vector<16x128xf32>
    %c0_2 = arith.constant 0 : index
    %c0_3 = arith.constant 0 : index
    %4 = vector.load %arg3[%c0_2, %c0_3] : memref<16x32xf32, #tpu.memory_space<vmem>>, vector<16x32xf32>
    %c0_4 = arith.constant 0 : index
    %c0_5 = arith.constant 0 : index
    %5 = vector.load %arg4[%c0_4, %c0_5] : memref<32x128xf32, #tpu.memory_space<vmem>>, vector<32x128xf32>
    %cst = arith.constant dense<0.000000e+00> : vector<16x128xf32>
    %6 = tpu.matmul %4, %5, %cst {dimension_numbers = #tpu.dot_dimension_numbers<[1], [0], [0], [1], [0, 0, 1, 1], [], []>} : vector<16x32xf32>, vector<32x128xf32>, vector<16x128xf32> -> vector<16x128xf32>
    %7 = arith.addf %3, %6 : vector<16x128xf32>
    %c0_6 = arith.constant 0 : index
    %c0_7 = arith.constant 0 : index
    %8 = vector.load %arg6[%c0_6, %c0_7] : memref<16x128xf32, #tpu.memory_space<vmem>>, vector<16x128xf32>
    tpu.vector_store %arg6[%c0_6, %c0_7], %7 {strides = array<i32>} : memref<16x128xf32, #tpu.memory_space<vmem>>, vector<16x128xf32>,
    %c0_i32_8 = arith.constant 0 : i32
    %9 = arith.cmpi eq, %arg2, %c0_i32_8 : i32
    %10 = arith.extui %9 : i1 to i32
    %c0_i32_9 = arith.constant 0 : i32
    %11 = arith.cmpi ne, %10, %c0_i32_9 : i32
    scf.if %11 {
      %c0_10 = arith.constant 0 : index
      %c0_11 = arith.constant 0 : index
      %12 = vector.load %arg6[%c0_10, %c0_11] : memref<16x128xf32, #tpu.memory_space<vmem>>, vector<16x128xf32>
      %cst_12 = arith.constant 0.176776692 : f32
      %13 = vector.broadcast %cst_12 : f32 to vector<16x128xf32>
      %14 = arith.mulf %13, %12 : vector<16x128xf32>
      %c0_13 = arith.constant 0 : index
      %c0_14 = arith.constant 0 : index
      %15 = vector.load %arg5[%c0_13, %c0_14] : memref<1x128xf32, #tpu.memory_space<vmem>>, vector<1x128xf32>
      %16 = vector.broadcast %15 : vector<1x128xf32> to vector<16x128xf32>
      %17 = arith.addf %14, %16 : vector<16x128xf32>
      %c0_15 = arith.constant 0 : index
      %c0_16 = arith.constant 0 : index
      %18 = vector.load %arg6[%c0_15, %c0_16] : memref<16x128xf32, #tpu.memory_space<vmem>>, vector<16x128xf32>
      tpu.vector_store %arg6[%c0_15, %c0_16], %17 {strides = array<i32>} : memref<16x128xf32, #tpu.memory_space<vmem>>, vector<16x128xf32>,
    } else {
    }
    return
  }
  func.func @transform_0(%arg0: i32, %arg1: i32, %arg2: i32) -> (i32, i32) {
    %c0_i32 = arith.constant 0 : i32
    return %arg0, %arg2 : i32, i32
  }
  func.func @transform_1(%arg0: i32, %arg1: i32, %arg2: i32) -> (i32, i32) {
    %c0_i32 = arith.constant 0 : i32
    return %arg2, %arg1 : i32, i32
  }
  func.func @transform_2(%arg0: i32, %arg1: i32, %arg2: i32) -> (i32, i32) {
    %c0_i32 = arith.constant 0 : i32
    %c0_i32_0 = arith.constant 0 : i32
    return %c0_i32, %arg1 : i32, i32
  }
  func.func @transform_3(%arg0: i32, %arg1: i32, %arg2: i32) -> (i32, i32) {
    %c0_i32 = arith.constant 0 : i32
    return %arg0, %arg1 : i32, i32
  }
}

</mosaic_0001>

<llo_original>
// kernel: tpu_custom_call.1
$region0: #{tpu_custom_call.1}
  #allocation0 [shape = 'u32[]', space=smem, size = 0x4, offset = 0x4, fixed_abs, tag = 'smem constant byte address 0x4 - core index']
  #allocation1 [shape = 'u32[144,128]{1,0:T(1,128)}', space=vmem, size = 0x12000, scoped, tag = 'internal scratch']
  %s0 = inlined_call_operand.hbm [shape: f32[16,32], index: 0, kind: input, shape index: {}]
  %s1 = inlined_call_operand.hbm [shape: f32[32,128], index: 1, kind: input, shape index: {}]
  %s2 = inlined_call_operand.vmem [shape: f32[1,128], index: 2, kind: input, shape index: {}]
  %s3 = inlined_call_operand.hbm [shape: f32[16,128], index: 3, kind: output, shape index: {}]
  %s4 = sld [smem:[#allocation0]]
  $region38: #{tpu_custom_call.1} parent=0
    _
  %s6 = ssub.s32 1, %s4
  %s7 = scalar_select 0, %s6, %s4
  $region1: #{tpu_custom_call.1} parent=0
    #allocation2 [shape = 'u8[8192]{0}', space=vmem, size = 0x2000, scoped, tag = 'input window, operand 0, single buffered']
    #allocation3 [shape = 's32[1]{0}', space=sflag, size = 0x4, scoped, tag = 'scoped memory for tpu_custom_call.1']
    #allocation4 [shape = 's32[1]{0}', space=sflag, size = 0x4, scoped, tag = 'scoped memory for tpu_custom_call.1']
    #allocation5 [shape = 'u8[16384]{0}', space=vmem, size = 0x4000, scoped, tag = 'input window, operand 1, single buffered']
    #allocation6 [shape = 's32[1]{0}', space=sflag, size = 0x4, scoped, tag = 'scoped memory for tpu_custom_call.1']
    #allocation7 [shape = 'u8[8192]{0}', space=vmem, size = 0x2000, scoped, tag = 'output window, operand 0, single buffered']
    %8 = vsyncpa [#allocation3], 0
    %9 = vsyncpa [#allocation6], 0
    %10 = vsyncpa [#allocation4], 0
    // Predicated region
    $region2: #{tpu_custom_call.1} parent=1 // pred_check
      _
    $region3: #{tpu_custom_call.1} parent=1 // pred_check_branch
      %12 = sbr.rel (0) target = $region5
    $region4: #{tpu_custom_call.1} parent=1 // pred_region
      %s14 = ssub.s32 256, 256
      %15 = vsyncadd [#allocation3], %s14
      %s16 = sshll.u32 [#allocation2], 4
      %s17 = int_to_ptr.vmem [resolvable:$true] %s16
      %22 = dma.hbm_to_vmem [thread:$0]  %s0, 256, %s17, [#allocation3], 128, 128, 8
    $region5: #{tpu_custom_call.1} parent=1 // pred_fallthru
      _
    // Predicated region
    $region6: #{tpu_custom_call.1} parent=1 // pred_check
      _
    $region7: #{tpu_custom_call.1} parent=1 // pred_check_branch
      %24 = sbr.rel (0) target = $region9
    $region8: #{tpu_custom_call.1} parent=1 // pred_region
      %s26 = ssub.s32 512, 512
      %27 = vsyncadd [#allocation6], %s26
      %s28 = sshll.u32 [#allocation5], 4
      %s29 = int_to_ptr.vmem [resolvable:$true] %s28
      %34 = dma.hbm_to_vmem [thread:$0]  %s1, 512, %s29, [#allocation6], 128, 128, 8
    $region9: #{tpu_custom_call.1} parent=1 // pred_fallthru
      _
    // Predicated region
    $region10: #{tpu_custom_call.1} parent=1 // pred_check
      _
    $region11: #{tpu_custom_call.1} parent=1 // pred_check_branch
      %36 = sbr.rel (0) target = $region13
    $region12: #{tpu_custom_call.1} parent=1 // pred_region
      _
    $region13: #{tpu_custom_call.1} parent=1 // pred_fallthru
      _
    // Predicated region
    $region14: #{tpu_custom_call.1} parent=1 // pred_check
      _
    $region15: #{tpu_custom_call.1} parent=1 // pred_check_branch
      %38 = sbr.rel (0) target = $region17
    $region16: #{tpu_custom_call.1} parent=1 // pred_region
      %39 = dma.done [#allocation3], 256
    $region17: #{tpu_custom_call.1} parent=1 // pred_fallthru
      _
    // Predicated region
    $region18: #{tpu_custom_call.1} parent=1 // pred_check
      _
    $region19: #{tpu_custom_call.1} parent=1 // pred_check_branch
      %41 = sbr.rel (0) target = $region21
    $region20: #{tpu_custom_call.1} parent=1 // pred_region
      %42 = dma.done [#allocation6], 512
    $region21: #{tpu_custom_call.1} parent=1 // pred_fallthru
      _
    %p43 = scmp.eq.s32.totalorder 0, 0
    // Predicated region
    $region22: #{tpu_custom_call.1} parent=1 // pred_check
      %p44 = pneg %p43
    $region23: #{tpu_custom_call.1} parent=1 // pred_check_branch
      %46 = sbr.rel (%p44) target = $region25
    $region24: #{tpu_custom_call.1} parent=1 // pred_region
      %47 = vst [vmem:[#allocation7] sm:$0xff] 0.0
      %48 = vst [vmem:[#allocation7 + $0x8] sm:$0xff] 0.0
    $region25: #{tpu_custom_call.1} parent=1 // pred_fallthru
      _
    %v49 = vld [vmem:[#allocation7] sm:$0xff]
    %v50 = vld [vmem:[#allocation7 + $0x8] sm:$0xff]
    %v51 = vld [vmem:[#allocation2] sm:$0xff]
    %v52 = vld [vmem:[#allocation2 + $0x8] sm:$0xff]
    %v53 = vld [vmem:[#allocation5] sm:$0xff]
    %v54 = vld [vmem:[#allocation5 + $0x8] sm:$0xff]
    %v55 = vld [vmem:[#allocation5 + $0x10] sm:$0xff]
    %v56 = vld [vmem:[#allocation5 + $0x18] sm:$0xff]
    %vm57 = vcmask 261120
    %v59 = vsel %vm57, %v51, 0
    %v62 = vsel %vm57, %v52, 0
    %64 = vmatprep.subr.mxu0 0.0
    %65 = vmatpush1.msra.mxu0 %v53
    %66 = vmatprep.subr.mxu0 0.0
    %67 = vmatpush1.msra.mxu0 %v54
    %68 = vmatprep.subr.mxu0 0.0
    %69 = vmatpush1.msra.mxu0 %v55
    %70 = vmatprep.subr.mxu0 0.0
    %71 = vmatpush1.msra.mxu0 %v56
    %72 = vmatprep.subr.mxu0 0.0
    %73 = vmatpush1.msra.mxu0 0.0
    %74 = vmatprep.subr.mxu0 0.0
    %75 = vmatpush1.msra.mxu0 0.0
    %76 = vmatprep.subr.mxu0 0.0
    %77 = vmatpush1.msra.mxu0 0.0
    %78 = vmatprep.subr.mxu0 0.0
    %79 = vmatpush1.msra.mxu0 0.0
    %80 = vmatprep.subr.mxu0 0.0
    %81 = vmatpush1.msra.mxu0 0.0
    %82 = vmatprep.subr.mxu0 0.0
    %83 = vmatpush1.msra.mxu0 0.0
    %84 = vmatprep.subr.mxu0 0.0
    %85 = vmatpush1.msra.mxu0 0.0
    %86 = vmatprep.subr.mxu0 0.0
    %87 = vmatpush1.msra.mxu0 0.0
    %88 = vmatprep.subr.mxu0 0.0
    %89 = vmatpush1.msra.mxu0 0.0
    %90 = vmatprep.subr.mxu0 0.0
    %91 = vmatpush1.msra.mxu0 0.0
    %92 = vmatprep.subr.mxu0 0.0
    %93 = vmatpush1.msra.mxu0 0.0
    %94 = vmatprep.subr.mxu0 0.0
    %95 = vmatpush1.msra.mxu0 0.0
    %96 = vmatprep.subr.mxu0 0.0
    %97 = vmatpush1.msra.mxu0 0.0
    %98 = vmatprep.subr.mxu0 0.0
    %99 = vmatpush1.msra.mxu0 0.0
    %100 = vmatprep.subr.mxu0 0.0
    %101 = vmatpush1.msra.mxu0 0.0
    %102 = vmatprep.subr.mxu0 0.0
    %103 = vmatpush1.msra.mxu0 0.0
    %104 = vmatprep.subr.mxu0 0.0
    %105 = vmatpush1.msra.mxu0 0.0
    %106 = vmatprep.subr.mxu0 0.0
    %107 = vmatpush1.msra.mxu0 0.0
    %108 = vmatprep.subr.mxu0 0.0
    %109 = vmatpush1.msra.mxu0 0.0
    %110 = vmatprep.subr.mxu0 0.0
    %111 = vmatpush1.msra.mxu0 0.0
    %112 = vmatprep.subr.mxu0 0.0
    %113 = vmatpush1.msra.mxu0 0.0
    %114 = vmatprep.subr.mxu0 0.0
    %115 = vmatpush1.msra.mxu0 0.0
    %116 = vmatprep.subr.mxu0 0.0
    %117 = vmatpush1.msra.mxu0 0.0
    %118 = vmatprep.subr.mxu0 0.0
    %119 = vmatpush1.msra.mxu0 0.0
    %120 = vmatprep.subr.mxu0 0.0
    %121 = vmatpush1.msra.mxu0 0.0
    %122 = vmatprep.subr.mxu0 0.0
    %123 = vmatpush1.msra.mxu0 0.0
    %124 = vmatprep.subr.mxu0 0.0
    %125 = vmatpush1.msra.mxu0 0.0
    %126 = vmatprep.subr.mxu0 0.0
    %127 = vmatpush1.msra.mxu0 0.0
    %128 = vmatprep.mubr.f32.mxu0 0.0
    %129 = vmatmul.mubr.f32.gmra.mrb[0].mxu0 %v59
    %v130 = vpop.f32.mrb[0].mxu0
    %v131 = vadd.f32 0.0, %v130
    %v132 = vpop.f32.mrb[0].mxu0
    %133 = vmatprep.mubr.f32.mxu0 0.0
    %134 = vmatmul.mubr.f32.gmra.mrb[0].mxu0 %v62
    %v135 = vpop.f32.mrb[0].mxu0
    %v136 = vadd.f32 0.0, %v135
    %v137 = vpop.f32.mrb[0].mxu0
    %138 = vdwg.mxu0
    %v139 = vadd.f32 %v49, %v131
    %v140 = vadd.f32 %v50, %v136
    %141 = vst [vmem:[#allocation7] sm:$0xff] %v139
    %142 = vst [vmem:[#allocation7 + $0x8] sm:$0xff] %v140
    // Predicated region
    $region26: #{tpu_custom_call.1} parent=1 // pred_check
      %p143 = pneg %p43
    $region27: #{tpu_custom_call.1} parent=1 // pred_check_branch
      %145 = sbr.rel (%p143) target = $region29
    $region28: #{tpu_custom_call.1} parent=1 // pred_region
      %v146 = vld [vmem:[#allocation7] sm:$0xff]
      %v147 = vld [vmem:[#allocation7 + $0x8] sm:$0xff]
      %v148 = vmul.f32 %v146, 0.17677669
      %v149 = vmul.f32 %v147, 0.17677669
      %v150 = vld [vmem:[%s2] sm:$0x1]
      %v152 = vlaneseq
      %v153 = vshrl.u32 %v152, 7
      %v154 = vsub.s32 0, %v153
      %v155 = vrot.slane %v150, %v154
      %v157 = vadd.f32 %v148, %v155
      %v158 = vadd.f32 %v149, %v155
      %159 = vst [vmem:[#allocation7] sm:$0xff] %v157
      %160 = vst [vmem:[#allocation7 + $0x8] sm:$0xff] %v158
    $region29: #{tpu_custom_call.1} parent=1 // pred_fallthru
      _
    // Predicated region
    $region30: #{tpu_custom_call.1} parent=1 // pred_check
      _
    $region31: #{tpu_custom_call.1} parent=1 // pred_check_branch
      %162 = sbr.rel (0) target = $region33
    $region32: #{tpu_custom_call.1} parent=1 // pred_region
      %s164 = ssub.s32 256, 256
      %165 = vsyncadd [#allocation4], %s164
      %s166 = sshll.u32 [#allocation7], 4
      %s167 = int_to_ptr.vmem [resolvable:$true] %s166
      %172 = dma.vmem_to_hbm [thread:$0]  %s167, 256, %s3, [#allocation4], 128, 128, 8
    $region33: #{tpu_custom_call.1} parent=1 // pred_fallthru
      _
    // Predicated region
    $region34: #{tpu_custom_call.1} parent=1 // pred_check
      _
    $region35: #{tpu_custom_call.1} parent=1 // pred_check_branch
      %174 = sbr.rel (0) target = $region37
    $region36: #{tpu_custom_call.1} parent=1 // pred_region
      %175 = dma.done [#allocation4], 256
    $region37: #{tpu_custom_call.1} parent=1 // pred_fallthru
      _
    %176 = vsyncpa [#allocation3], 1
    %177 = vsyncpa [#allocation6], 1
    %178 = vsyncpa [#allocation4], 1

</llo_original>
